<compile_context>
chip_gen: v6e
topology: v6e:2x2x1
jax: 0.10.0
libtpu: 0.0.40
codegen_flags: <defaults>
</compile_context>

<pallas_src>
import functools

import jax
import jax.numpy as jnp
from jax.experimental import pallas as pl
from jax.experimental.pallas import tpu as pltpu


def _complex_score_kernel(q_ref, ent_ref, score_ref):
    # q_ref:   (B, 2R)   resident (grid-invariant) query block
    # ent_ref: (2R, tn)  K-major tile of the streamed entity table
    # score:   (B, tn)   f32 scores; one fused K=2R MXU contraction, no
    #                    transposes / slicing of the streamed tile.
    score_ref[...] = jnp.dot(
        q_ref[...], ent_ref[...], preferred_element_type=jnp.float32
    )


def make_streaming_table(ent_weight, dtype=jnp.bfloat16):
    """One-time (model-init) prep of the streamed entity table.

    Returns a (2R, N) K-major copy in the streaming dtype (bf16 by default:
    half the HBM bytes on the dominant stream, f32 accumulation in-kernel).
    Creating it once avoids any per-call pad / cast / transpose of the table.
    """
    return jnp.asarray(ent_weight.T, dtype=dtype)


def _pick_entity_tile(n_entities, batch, two_r, itemsize, tn_req):
    # Lane-dense tiles (multiples of 128), unless a single tile covers the
    # whole (small) table.  The budget keeps the double-buffered (2R, tn)
    # entity tile + (B, tn) f32 score tile (+ resident q) under ~40 MiB, so
    # it fits v7x's 64 MiB VMEM per TensorCore with headroom; tn is also
    # capped at ~N/2 so the parallel axis keeps >= 2 tiles for v7x's 2 TCs.
    budget = 40 * 1024 * 1024 - 2 * batch * two_r * itemsize
    per_col = 2 * (two_r * itemsize + batch * 4)
    tn_cap = max(128, (budget // per_col) // 128 * 128)
    tn = max(128, (min(int(tn_req), tn_cap) // 128) * 128)
    if n_entities <= 256:
        return n_entities                       # single full-extent tile
    half = max(128, (n_entities // 2) // 128 * 128)
    return min(tn, half)


@functools.partial(jax.jit, static_argnames=("rank", "tn"))
def complex_forward(x, ent_weight, rel_weight, ent_stream, rank, tn=4096):
    """ComplEx.forward: returns (scores (B, N) f32, (lhs_n, rel_n, rhs_n)).

    `ent_stream` is the init-time (2*rank, N) streaming copy of the entity
    table from `make_streaming_table`; its dtype is the streaming/compute
    dtype of the scoring matmul (bf16 by default, f32 for exact numerics).
    """
    B = x.shape[0]
    N, two_r = ent_weight.shape
    assert two_r == 2 * rank
    assert ent_stream.shape == (two_r, N)

    # ---- grid-invariant glue in plain JAX (gathers, query, norms) ----------
    lhs = ent_weight[x[:, 0]]   # (B, 2R)
    rel = rel_weight[x[:, 1]]   # (B, 2R)
    rhs = ent_weight[x[:, 2]]   # (B, 2R)

    lr, li = lhs[:, :rank], lhs[:, rank:]
    rr, ri = rel[:, :rank], rel[:, rank:]
    hr, hi = rhs[:, :rank], rhs[:, rank:]

    # ComplEx query, concatenated so the kernel does ONE K=2R matmul.
    q = jnp.concatenate([lr * rr - li * ri, lr * ri + li * rr], axis=1)
    q = q.astype(ent_stream.dtype)          # tiny (B, 2R) cast only

    lhs_n = jnp.sqrt(lr * lr + li * li)
    rel_n = jnp.sqrt(rr * rr + ri * ri)
    rhs_n = jnp.sqrt(hr * hr + hi * hi)

    # ---- entity-dimension tiling (no padding: partial final block) ---------
    itemsize = jnp.dtype(ent_stream.dtype).itemsize
    tile_n = _pick_entity_tile(N, B, two_r, itemsize, tn)
    grid = (pl.cdiv(N, tile_n),)

    # Double-buffered entity + score tiles + resident query, with headroom,
    # clamped below v7x's 64 MiB physical VMEM.
    need = (2 * (tile_n * two_r * itemsize + B * tile_n * 4)
            + 2 * B * two_r * itemsize)
    vmem_limit_bytes = int(min(max(2 * need, 32 * 1024 * 1024),
                               56 * 1024 * 1024))

    cost = pl.CostEstimate(
        flops=2 * B * two_r * N,
        transcendentals=0,
        bytes_accessed=(N * two_r * itemsize      # streamed entity table
                        + B * N * 4               # f32 scores out
                        + B * two_r * itemsize),  # query in
    )

    # TODO(synk): for very large B, add an inner B grid axis (innermost, so
    # the entity tile's block index is constant and stays resident) instead of
    # growing the (B, tn) block; int8 (v5e/v6e) / fp8-e4m3 (v7x) streaming of
    # ent_stream with per-row scales would halve bytes again over bf16.
    scores = pl.pallas_call(
        _complex_score_kernel,
        out_shape=jax.ShapeDtypeStruct((B, N), jnp.float32),
        grid_spec=pltpu.PrefetchScalarGridSpec(
            num_scalar_prefetch=0,
            grid=grid,
            in_specs=[
                pl.BlockSpec((B, two_r), lambda j: (0, 0)),       # query (resident)
                pl.BlockSpec((two_r, tile_n), lambda j: (0, j)),  # K-major entity tile
            ],
            out_specs=pl.BlockSpec((B, tile_n), lambda j: (0, j)),
        ),
        compiler_params=pltpu.CompilerParams(
            dimension_semantics=("parallel",),
            vmem_limit_bytes=vmem_limit_bytes,
        ),
        cost_estimate=cost,
    )(q, ent_stream)

    return scores, (lhs_n, rel_n, rhs_n)


def reference_forward(x, ent_weight, rel_weight, rank):
    hp = jax.lax.Precision.HIGHEST
    lhs = ent_weight[x[:, 0]]
    rel = rel_weight[x[:, 1]]
    rhs = ent_weight[x[:, 2]]
    lr, li = lhs[:, :rank], lhs[:, rank:]
    rr, ri = rel[:, :rank], rel[:, rank:]
    hr, hi = rhs[:, :rank], rhs[:, rank:]
    er, ei = ent_weight[:, :rank], ent_weight[:, rank:]
    scores = (jnp.dot(lr * rr - li * ri, er.T, precision=hp)
              + jnp.dot(lr * ri + li * rr, ei.T, precision=hp))
    return scores, (jnp.sqrt(lr**2 + li**2), jnp.sqrt(rr**2 + ri**2),
                    jnp.sqrt(hr**2 + hi**2))


if __name__ == "__main__":
    # Small shapes; n_entities deliberately NOT a multiple of the tile (or of
    # 128) to exercise the partial-final-block path (no padding copy).
    n_entities = 300
    n_relations = 32
    rank = 128
    init_size = 0.001
    batch = 8

    key = jax.random.PRNGKey(0)
    k_ent, k_rel, k_l, k_r, k_h = jax.random.split(key, 5)

    # nn.Embedding default init is N(0, 1); the module scales by init_size.
    ent_weight = (jax.random.normal(k_ent, (n_entities, 2 * rank), jnp.float32)
                  * init_size)
    rel_weight = (jax.random.normal(k_rel, (n_relations, 2 * rank), jnp.float32)
                  * init_size)

    x = jnp.stack(
        [
            jax.random.randint(k_l, (batch,), 0, n_entities),
            jax.random.randint(k_r, (batch,), 0, n_relations),
            jax.random.randint(k_h, (batch,), 0, n_entities),
        ],
        axis=1,
    ).astype(jnp.int32)

    ref_scores, ref_norms = reference_forward(x, ent_weight, rel_weight, rank)
    scale = float(jnp.max(jnp.abs(ref_scores)))

    # ---- f32 streaming path: numerics match the reference (MXU pass /
    #      accumulation-order differences only; scale-relative check). -------
    ent_stream_f32 = make_streaming_table(ent_weight, jnp.float32)
    scores32, norms32 = complex_forward(x, ent_weight, rel_weight,
                                        ent_stream_f32, rank)
    jax.block_until_ready((scores32, norms32))
    assert scores32.shape == ref_scores.shape
    assert float(jnp.max(jnp.abs(scores32 - ref_scores))) <= 3e-2 * scale + 1e-12
    for a, b in zip(norms32, ref_norms):
        assert jnp.allclose(a, b, atol=1e-6, rtol=1e-5)

    # ---- bf16 streaming path (default; ~2x less HBM traffic): looser,
    #      scale-relative tolerance since the streamed operands are bf16. ----
    ent_stream_bf16 = make_streaming_table(ent_weight)  # bfloat16
    scores16, norms16 = complex_forward(x, ent_weight, rel_weight,
                                        ent_stream_bf16, rank)
    jax.block_until_ready((scores16, norms16))
    assert scores16.dtype == jnp.float32
    assert float(jnp.max(jnp.abs(scores16 - ref_scores))) <= 6e-2 * scale + 1e-12
    for a, b in zip(norms16, ref_norms):
        assert jnp.allclose(a, b, atol=1e-6, rtol=1e-5)

    print("KERNEL_OK")
</pallas_src>

<mosaic_0001>
module attributes {stable_mosaic.version = 11 : i64} {
  func.func @_complex_score_kernel(%arg0: i32, %arg1: memref<8x256xf32, #tpu.memory_space<vmem>>, %arg2: memref<256x128xf32, #tpu.memory_space<vmem>>, %arg3: memref<8x128xf32, #tpu.memory_space<vmem>>) attributes {dimension_semantics = [#tpu.dimension_semantics<parallel>], iteration_bounds = array<i64: 3>, scalar_prefetch = 0 : i64, scratch_operands = 0 : i64, tpu.core_type = #tpu.core_type<tc>, window_params = [{pipeline_mode = #tpu.pipeline_mode<synchronous>, transform_indices = @transform_0, window_bounds = array<i64: 8, 256>}, {transform_indices = @transform_1, window_bounds = array<i64: 256, 128>}, {transform_indices = @transform_2, window_bounds = array<i64: 8, 128>}]} {
    %c0 = arith.constant 0 : index
    %c0_0 = arith.constant 0 : index
    %0 = vector.load %arg1[%c0, %c0_0] : memref<8x256xf32, #tpu.memory_space<vmem>>, vector<8x256xf32>
    %c0_1 = arith.constant 0 : index
    %c0_2 = arith.constant 0 : index
    %1 = vector.load %arg2[%c0_1, %c0_2] : memref<256x128xf32, #tpu.memory_space<vmem>>, vector<256x128xf32>
    %cst = arith.constant dense<0.000000e+00> : vector<8x128xf32>
    %2 = tpu.matmul %0, %1, %cst {dimension_numbers = #tpu.dot_dimension_numbers<[1], [0], [0], [1], [0, 0, 1, 1], [], []>} : vector<8x256xf32>, vector<256x128xf32>, vector<8x128xf32> -> vector<8x128xf32>
    %c0_3 = arith.constant 0 : index
    %c0_4 = arith.constant 0 : index
    %3 = vector.load %arg3[%c0_3, %c0_4] : memref<8x128xf32, #tpu.memory_space<vmem>>, vector<8x128xf32>
    tpu.vector_store %arg3[%c0_3, %c0_4], %2 {strides = array<i32>} : memref<8x128xf32, #tpu.memory_space<vmem>>, vector<8x128xf32>,
    return
  }
  func.func @transform_0(%arg0: i32) -> (i32, i32) {
    %c0_i32 = arith.constant 0 : i32
    %c0_i32_0 = arith.constant 0 : i32
    %c0_i32_1 = arith.constant 0 : i32
    return %c0_i32, %c0_i32_0 : i32, i32
  }
  func.func @transform_1(%arg0: i32) -> (i32, i32) {
    %c0_i32 = arith.constant 0 : i32
    %c0_i32_0 = arith.constant 0 : i32
    return %c0_i32, %arg0 : i32, i32
  }
  func.func @transform_2(%arg0: i32) -> (i32, i32) {
    %c0_i32 = arith.constant 0 : i32
    %c0_i32_0 = arith.constant 0 : i32
    return %c0_i32, %arg0 : i32, i32
  }
}

</mosaic_0001>

<llo_original>
// kernel: complex_forward.1
$region0: #{complex_forward.1}
  #allocation0 [shape = 'u32[]', space=smem, size = 0x4, offset = 0x4, fixed_abs, tag = 'smem constant byte address 0x4 - core index']
  #allocation1 [shape = 'u32[144,128]{1,0:T(1,128)}', space=vmem, size = 0x12000, scoped, tag = 'internal scratch']
  %s0 = inlined_call_operand.vmem [shape: f32[8,256], index: 0, kind: input, shape index: {}]
  %s1 = inlined_call_operand.vmem [shape: f32[256,300], index: 1, kind: input, shape index: {}]
  %s2 = inlined_call_operand.hbm [shape: f32[8,300], index: 2, kind: output, shape index: {}]
  %s3 = sld [smem:[#allocation0]]
  $region79: #{complex_forward.1} parent=0
    _
  %s5 = ssub.s32 1, %s3
  %s6 = scalar_select 0, %s5, %s3
  $region1: #{complex_forward.1} parent=0
    #allocation2 [shape = 'u8[262144]{0}', space=vmem, size = 0x40000, scoped, tag = 'input window, operand 1']
    #allocation3 [shape = 'u8[8192]{0}', space=vmem, size = 0x2000, scoped, tag = 'output window, operand 0']
    #allocation4 [shape = 's32[2]{0}', space=sflag, size = 0x8, scoped, tag = 'scoped memory for complex_forward.1']
    %7 = vsyncpa [#allocation4], 0
    %s8 = scalar_lea.sflag [#allocation4], 1
    %9 = vsyncpa %s8, 0
    loop: start=0, step=1, limit=5
    $region2: #{complex_forward.1} parent=1 // loop_pre_header
      _
    $region3: #{complex_forward.1} parent=1 // loop_header
      %s11 = sphi 0, %s15
      %p12 = scmp.ge.s32.totalorder %s11, 5
      %s19 = sphi 0, %s19
      %s21 = sphi 0, %s19
      %s22 = sphi 0, %s21
      %s36 = sphi 0, %s22
      %s42 = sphi 0, %s44
      %s45 = sphi 0, %s42
      %s46 = sphi 0, %s45
      %s62 = sphi 0, %s46
      %s68 = sphi 0, %s70
      %s71 = sphi 0, %s68
      %s72 = sphi 0, %s71
      %s88 = sphi 0, %s72
    $region4: #{complex_forward.1} parent=1 // loop_header_branch
      %14 = sbr.rel (%p12) target = $region8
    $region5: #{complex_forward.1} parent=1 // loop_body
      %s16 = ssub.s32 %s11, 1
      %s17 = ssub.s32 %s11, 2
      %s18 = sadd.s32 %s11, 1
      %s20 = sadd.s32 %s19, 1
      %p23 = scmp.eq.s32.totalorder %s11, 2
      %p24 = scmp.ne.s32.totalorder %s19, %s21
      %p25 = scmp.eq.s32.totalorder %s11, 0
      %p26 = por %p24, %p25
      %p27 = scmp.ne.s32.totalorder %s19, %s21
      %p28 = scmp.eq.s32.totalorder %s16, 2
      %p29 = por %p27, %p28
      %p30 = scmp.ne.s32.totalorder %s21, %s22
      %p31 = scmp.eq.s32.totalorder %s16, 0
      %p32 = por %p30, %p31
      %p33 = scmp.ne.s32.totalorder %s21, %s22
      %p34 = scmp.eq.s32.totalorder %s17, 2
      %p35 = por %p33, %p34
      %p37 = scmp.ne.s32.totalorder %s22, %s36
      %p38 = scmp.eq.s32.totalorder %s17, 0
      %p39 = por %p37, %p38
      %s40 = ssub.s32 %s11, %s18
      %p41 = scmp.eq.s32.totalorder %s40, 0
      %s43 = sadd.s32 %s42, 1
      %s44 = scalar_select %p41, %s42, %s43
      %p47 = pneg %p41
      %p48 = scmp.eq.s32.totalorder %s11, 2
      %p49 = por %p47, %p48
      %p50 = scmp.ne.s32.totalorder %s42, %s45
      %p51 = scmp.eq.s32.totalorder %s11, 0
      %p52 = por %p50, %p51
      %p53 = scmp.ne.s32.totalorder %s42, %s45
      %p54 = scmp.eq.s32.totalorder %s16, 2
      %p55 = por %p53, %p54
      %p56 = scmp.ne.s32.totalorder %s45, %s46
      %p57 = scmp.eq.s32.totalorder %s16, 0
      %p58 = por %p56, %p57
      %p59 = scmp.ne.s32.totalorder %s45, %s46
      %p60 = scmp.eq.s32.totalorder %s17, 2
      %p61 = por %p59, %p60
      %p63 = scmp.ne.s32.totalorder %s46, %s62
      %p64 = scmp.eq.s32.totalorder %s17, 0
      %p65 = por %p63, %p64
      %s66 = ssub.s32 %s11, %s18
      %p67 = scmp.eq.s32.totalorder %s66, 0
      %s69 = sadd.s32 %s68, 1
      %s70 = scalar_select %p67, %s68, %s69
      %p73 = pneg %p67
      %p74 = scmp.eq.s32.totalorder %s11, 2
      %p75 = por %p73, %p74
      %p76 = scmp.ne.s32.totalorder %s68, %s71
      %p77 = scmp.eq.s32.totalorder %s11, 0
      %p78 = por %p76, %p77
      %p79 = scmp.ne.s32.totalorder %s68, %s71
      %p80 = scmp.eq.s32.totalorder %s16, 2
      %p81 = por %p79, %p80
      %p82 = scmp.ne.s32.totalorder %s71, %s72
      %p83 = scmp.eq.s32.totalorder %s16, 0
      %p84 = por %p82, %p83
      %p85 = scmp.ne.s32.totalorder %s71, %s72
      %p86 = scmp.eq.s32.totalorder %s17, 2
      %p87 = por %p85, %p86
      %p89 = scmp.ne.s32.totalorder %s72, %s88
      %p90 = scmp.eq.s32.totalorder %s17, 0
      %p91 = por %p89, %p90
      %p92 = scmp.le.s32.totalorder 1, %s11
      %p93 = scmp.lt.s32.totalorder %s11, 4
      %p94 = pnand %p92, %p93
      %p95 = pneg %p94
      // Predicated region
      $region9: #{complex_forward.1} parent=5 // pred_check
        _
      $region10: #{complex_forward.1} parent=5 // pred_check_branch
        %97 = sbr.rel (%p94) target = $region12
      $region11: #{complex_forward.1} parent=5 // pred_region
        %s98 = ssub.s32 %s11, 1
        // Predicated region
        $region13: #{complex_forward.1} parent=11 // pred_check
          %p99 = pneg %p32
        $region14: #{complex_forward.1} parent=11 // pred_check_branch
          %101 = sbr.rel (%p99) target = $region16
        $region15: #{complex_forward.1} parent=11 // pred_region
          _
        $region16: #{complex_forward.1} parent=11 // pred_fallthru
          _
      $region12: #{complex_forward.1} parent=5 // pred_fallthru
        _
      %p102 = scmp.lt.s32.totalorder %s11, 3
      // Predicated region
      $region17: #{complex_forward.1} parent=5 // pred_check
        %p103 = pneg %p102
      $region18: #{complex_forward.1} parent=5 // pred_check_branch
        %105 = sbr.rel (%p103) target = $region20
      $region19: #{complex_forward.1} parent=5 // pred_region
        // Predicated region
        $region21: #{complex_forward.1} parent=19 // pred_check
          %p106 = pneg %p52
        $region22: #{complex_forward.1} parent=19 // pred_check_branch
          %108 = sbr.rel (%p106) target = $region24
        $region23: #{complex_forward.1} parent=19 // pred_region
          %s109 = sand.u32 %s42, 1
          %s110 = sand.u32 %s42, 1
          %s111 = smul.addr %s110, 256
          %s112 = scalar_lea.vmem [#allocation2], %s111
          %s113 = smul.addr %s11, 8
          %s114 = scalar_lea.vmem %s1, %s113
          // Predicated region
          $region25: #{complex_forward.1} parent=23 // pred_check
            _
          $region26: #{complex_forward.1} parent=23 // pred_check_branch
            %116 = sbr.rel (0) target = $region28
          $region27: #{complex_forward.1} parent=23 // pred_region
            // Predicated region
            $region29: #{complex_forward.1} parent=27 // pred_check
              _
            $region30: #{complex_forward.1} parent=27 // pred_check_branch
              %118 = sbr.rel (0) target = $region32
            $region31: #{complex_forward.1} parent=27 // pred_region
              // Predicated region
              $region44: #{complex_forward.1} parent=31 // pred_check
                _
              $region45: #{complex_forward.1} parent=31 // pred_check_branch
                %196 = sbr.rel (0) target = $region47
              $region46: #{complex_forward.1} parent=31 // pred_region
                loop: start=0, step=1, limit=1
                $region48: #{complex_forward.1} parent=46 // loop_pre_header
                  _
                $region49: #{complex_forward.1} parent=46 // loop_header
                  %s198 = sphi 0, %s202
                  %p199 = scmp.ge.s32.totalorder %s198, 1
                  %s203 = sphi %s114, %s114
                  %s204 = sphi %s112, %s112
                $region50: #{complex_forward.1} parent=46 // loop_header_branch
                  %201 = sbr.rel (%p199) target = $region54
                $region51: #{complex_forward.1} parent=46 // loop_body
                  %v205 = vld [vmem:[%s203] sm:$0xff]
                  %206 = vst [vmem:[%s204] sm:$0xff] %v205
                  %v207 = vld [vmem:[%s203 + $0x18] sm:$0xff]
                  %208 = vst [vmem:[%s204 + $0x8] sm:$0xff] %v207
                  %v209 = vld [vmem:[%s203 + $0x30] sm:$0xff]
                  %210 = vst [vmem:[%s204 + $0x10] sm:$0xff] %v209
                  %v211 = vld [vmem:[%s203 + $0x48] sm:$0xff]
                  %212 = vst [vmem:[%s204 + $0x18] sm:$0xff] %v211
                  %v213 = vld [vmem:[%s203 + $0x60] sm:$0xff]
                  %214 = vst [vmem:[%s204 + $0x20] sm:$0xff] %v213
                  %v215 = vld [vmem:[%s203 + $0x78] sm:$0xff]
                  %216 = vst [vmem:[%s204 + $0x28] sm:$0xff] %v215
                  %v217 = vld [vmem:[%s203 + $0x90] sm:$0xff]
                  %218 = vst [vmem:[%s204 + $0x30] sm:$0xff] %v217
                  %v219 = vld [vmem:[%s203 + $0xa8] sm:$0xff]
                  %220 = vst [vmem:[%s204 + $0x38] sm:$0xff] %v219
                  %v221 = vld [vmem:[%s203 + $0xc0] sm:$0xff]
                  %222 = vst [vmem:[%s204 + $0x40] sm:$0xff] %v221
                  %v223 = vld [vmem:[%s203 + $0xd8] sm:$0xff]
                  %224 = vst [vmem:[%s204 + $0x48] sm:$0xff] %v223
                  %v225 = vld [vmem:[%s203 + $0xf0] sm:$0xff]
                  %226 = vst [vmem:[%s204 + $0x50] sm:$0xff] %v225
                  %v227 = vld [vmem:[%s203 + $0x108] sm:$0xff]
                  %228 = vst [vmem:[%s204 + $0x58] sm:$0xff] %v227
                  %v229 = vld [vmem:[%s203 + $0x120] sm:$0xff]
                  %230 = vst [vmem:[%s204 + $0x60] sm:$0xff] %v229
                  %v231 = vld [vmem:[%s203 + $0x138] sm:$0xff]
                  %232 = vst [vmem:[%s204 + $0x68] sm:$0xff] %v231
                  %v233 = vld [vmem:[%s203 + $0x150] sm:$0xff]
                  %234 = vst [vmem:[%s204 + $0x70] sm:$0xff] %v233
                  %v235 = vld [vmem:[%s203 + $0x168] sm:$0xff]
                  %236 = vst [vmem:[%s204 + $0x78] sm:$0xff] %v235
                  %v237 = vld [vmem:[%s203 + $0x180] sm:$0xff]
                  %238 = vst [vmem:[%s204 + $0x80] sm:$0xff] %v237
                  %v239 = vld [vmem:[%s203 + $0x198] sm:$0xff]
                  %240 = vst [vmem:[%s204 + $0x88] sm:$0xff] %v239
                  %v241 = vld [vmem:[%s203 + $0x1b0] sm:$0xff]
                  %242 = vst [vmem:[%s204 + $0x90] sm:$0xff] %v241
                  %v243 = vld [vmem:[%s203 + $0x1c8] sm:$0xff]
                  %244 = vst [vmem:[%s204 + $0x98] sm:$0xff] %v243
                  %v245 = vld [vmem:[%s203 + $0x1e0] sm:$0xff]
                  %246 = vst [vmem:[%s204 + $0xa0] sm:$0xff] %v245
                  %v247 = vld [vmem:[%s203 + $0x1f8] sm:$0xff]
                  %248 = vst [vmem:[%s204 + $0xa8] sm:$0xff] %v247
                  %v249 = vld [vmem:[%s203 + $0x210] sm:$0xff]
                  %250 = vst [vmem:[%s204 + $0xb0] sm:$0xff] %v249
                  %v251 = vld [vmem:[%s203 + $0x228] sm:$0xff]
                  %252 = vst [vmem:[%s204 + $0xb8] sm:$0xff] %v251
                  %v253 = vld [vmem:[%s203 + $0x240] sm:$0xff]
                  %254 = vst [vmem:[%s204 + $0xc0] sm:$0xff] %v253
                  %v255 = vld [vmem:[%s203 + $0x258] sm:$0xff]
                  %256 = vst [vmem:[%s204 + $0xc8] sm:$0xff] %v255
                  %v257 = vld [vmem:[%s203 + $0x270] sm:$0xff]
                  %258 = vst [vmem:[%s204 + $0xd0] sm:$0xff] %v257
                  %v259 = vld [vmem:[%s203 + $0x288] sm:$0xff]
                  %260 = vst [vmem:[%s204 + $0xd8] sm:$0xff] %v259
                  %v261 = vld [vmem:[%s203 + $0x2a0] sm:$0xff]
                  %262 = vst [vmem:[%s204 + $0xe0] sm:$0xff] %v261
                  %v263 = vld [vmem:[%s203 + $0x2b8] sm:$0xff]
                  %264 = vst [vmem:[%s204 + $0xe8] sm:$0xff] %v263
                  %v265 = vld [vmem:[%s203 + $0x2d0] sm:$0xff]
                  %266 = vst [vmem:[%s204 + $0xf0] sm:$0xff] %v265
                  %v267 = vld [vmem:[%s203 + $0x2e8] sm:$0xff]
                  %268 = vst [vmem:[%s204 + $0xf8] sm:$0xff] %v267
                $region52: #{complex_forward.1} parent=46 // loop_footer
                  %s202 = sadd.s32 1, %s198
                $region53: #{complex_forward.1} parent=46 // loop_footer_branch
                  %197 = sbr.rel target = $region49
                $region54: #{complex_forward.1} parent=46 // loop_exit
                  _
              $region47: #{complex_forward.1} parent=31 // pred_fallthru
                _
              // Predicated region
              $region55: #{complex_forward.1} parent=31 // pred_check
                _
              $region56: #{complex_forward.1} parent=31 // pred_check_branch
                %270 = sbr.rel target = $region58
              $region57: #{complex_forward.1} parent=31 // pred_region
                _
              $region58: #{complex_forward.1} parent=31 // pred_fallthru
                _
            $region32: #{complex_forward.1} parent=27 // pred_fallthru
              _
            // Predicated region
            $region33: #{complex_forward.1} parent=27 // pred_check
              _
            $region34: #{complex_forward.1} parent=27 // pred_check_branch
              %120 = sbr.rel target = $region36
            $region35: #{complex_forward.1} parent=27 // pred_region
              %s122 = ssub.s32 256, 1
              loop: start=0, step=1, limit=1
              $region37: #{complex_forward.1} parent=35 // loop_pre_header
                _
              $region38: #{complex_forward.1} parent=35 // loop_header
                %s124 = sphi 0, %s128
                %p125 = scmp.ge.s32.totalorder %s124, 1
                %s129 = sphi %s114, %s114
                %s130 = sphi %s112, %s112
              $region39: #{complex_forward.1} parent=35 // loop_header_branch
                %127 = sbr.rel (%p125) target = $region43
              $region40: #{complex_forward.1} parent=35 // loop_body
                %v131 = vld [vmem:[%s129] sm:%s122]
                %132 = vst [vmem:[%s130] sm:%s122] %v131
                %v133 = vld [vmem:[%s129 + $0x18] sm:%s122]
                %134 = vst [vmem:[%s130 + $0x8] sm:%s122] %v133
                %v135 = vld [vmem:[%s129 + $0x30] sm:%s122]
                %136 = vst [vmem:[%s130 + $0x10] sm:%s122] %v135
                %v137 = vld [vmem:[%s129 + $0x48] sm:%s122]
                %138 = vst [vmem:[%s130 + $0x18] sm:%s122] %v137
                %v139 = vld [vmem:[%s129 + $0x60] sm:%s122]
                %140 = vst [vmem:[%s130 + $0x20] sm:%s122] %v139
                %v141 = vld [vmem:[%s129 + $0x78] sm:%s122]
                %142 = vst [vmem:[%s130 + $0x28] sm:%s122] %v141
                %v143 = vld [vmem:[%s129 + $0x90] sm:%s122]
                %144 = vst [vmem:[%s130 + $0x30] sm:%s122] %v143
                %v145 = vld [vmem:[%s129 + $0xa8] sm:%s122]
                %146 = vst [vmem:[%s130 + $0x38] sm:%s122] %v145
                %v147 = vld [vmem:[%s129 + $0xc0] sm:%s122]
                %148 = vst [vmem:[%s130 + $0x40] sm:%s122] %v147
                %v149 = vld [vmem:[%s129 + $0xd8] sm:%s122]
                %150 = vst [vmem:[%s130 + $0x48] sm:%s122] %v149
                %v151 = vld [vmem:[%s129 + $0xf0] sm:%s122]
                %152 = vst [vmem:[%s130 + $0x50] sm:%s122] %v151
                %v153 = vld [vmem:[%s129 + $0x108] sm:%s122]
                %154 = vst [vmem:[%s130 + $0x58] sm:%s122] %v153
                %v155 = vld [vmem:[%s129 + $0x120] sm:%s122]
                %156 = vst [vmem:[%s130 + $0x60] sm:%s122] %v155
                %v157 = vld [vmem:[%s129 + $0x138] sm:%s122]
                %158 = vst [vmem:[%s130 + $0x68] sm:%s122] %v157
                %v159 = vld [vmem:[%s129 + $0x150] sm:%s122]
                %160 = vst [vmem:[%s130 + $0x70] sm:%s122] %v159
                %v161 = vld [vmem:[%s129 + $0x168] sm:%s122]
                %162 = vst [vmem:[%s130 + $0x78] sm:%s122] %v161
                %v163 = vld [vmem:[%s129 + $0x180] sm:%s122]
                %164 = vst [vmem:[%s130 + $0x80] sm:%s122] %v163
                %v165 = vld [vmem:[%s129 + $0x198] sm:%s122]
                %166 = vst [vmem:[%s130 + $0x88] sm:%s122] %v165
                %v167 = vld [vmem:[%s129 + $0x1b0] sm:%s122]
                %168 = vst [vmem:[%s130 + $0x90] sm:%s122] %v167
                %v169 = vld [vmem:[%s129 + $0x1c8] sm:%s122]
                %170 = vst [vmem:[%s130 + $0x98] sm:%s122] %v169
                %v171 = vld [vmem:[%s129 + $0x1e0] sm:%s122]
                %172 = vst [vmem:[%s130 + $0xa0] sm:%s122] %v171
                %v173 = vld [vmem:[%s129 + $0x1f8] sm:%s122]
                %174 = vst [vmem:[%s130 + $0xa8] sm:%s122] %v173
                %v175 = vld [vmem:[%s129 + $0x210] sm:%s122]
                %176 = vst [vmem:[%s130 + $0xb0] sm:%s122] %v175
                %v177 = vld [vmem:[%s129 + $0x228] sm:%s122]
                %178 = vst [vmem:[%s130 + $0xb8] sm:%s122] %v177
                %v179 = vld [vmem:[%s129 + $0x240] sm:%s122]
                %180 = vst [vmem:[%s130 + $0xc0] sm:%s122] %v179
                %v181 = vld [vmem:[%s129 + $0x258] sm:%s122]
                %182 = vst [vmem:[%s130 + $0xc8] sm:%s122] %v181
                %v183 = vld [vmem:[%s129 + $0x270] sm:%s122]
                %184 = vst [vmem:[%s130 + $0xd0] sm:%s122] %v183
                %v185 = vld [vmem:[%s129 + $0x288] sm:%s122]
                %186 = vst [vmem:[%s130 + $0xd8] sm:%s122] %v185
                %v187 = vld [vmem:[%s129 + $0x2a0] sm:%s122]
                %188 = vst [vmem:[%s130 + $0xe0] sm:%s122] %v187
                %v189 = vld [vmem:[%s129 + $0x2b8] sm:%s122]
                %190 = vst [vmem:[%s130 + $0xe8] sm:%s122] %v189
                %v191 = vld [vmem:[%s129 + $0x2d0] sm:%s122]
                %192 = vst [vmem:[%s130 + $0xf0] sm:%s122] %v191
                %v193 = vld [vmem:[%s129 + $0x2e8] sm:%s122]
                %194 = vst [vmem:[%s130 + $0xf8] sm:%s122] %v193
              $region41: #{complex_forward.1} parent=35 // loop_footer
                %s128 = sadd.s32 1, %s124
              $region42: #{complex_forward.1} parent=35 // loop_footer_branch
                %123 = sbr.rel target = $region38
              $region43: #{complex_forward.1} parent=35 // loop_exit
                _
            $region36: #{complex_forward.1} parent=27 // pred_fallthru
              _
          $region28: #{complex_forward.1} parent=23 // pred_fallthru
            _
          %271 = vnop
        $region24: #{complex_forward.1} parent=19 // pred_fallthru
          _
      $region20: #{complex_forward.1} parent=5 // pred_fallthru
        _
      %p272 = scmp.le.s32.totalorder 1, %s11
      %p273 = scmp.lt.s32.totalorder %s11, 4
      %p274 = pnand %p272, %p273
      %p275 = pneg %p274
      // Predicated region
      $region59: #{complex_forward.1} parent=5 // pred_check
        _
      $region60: #{complex_forward.1} parent=5 // pred_check_branch
        %277 = sbr.rel (%p274) target = $region62
      $region61: #{complex_forward.1} parent=5 // pred_region
        %s278 = ssub.s32 %s11, 1
        %s279 = sand.u32 %s45, 1
        %s280 = sand.u32 %s45, 1
        %s281 = smul.addr %s280, 256
        %s282 = scalar_lea.vmem [#allocation2], %s281
        // Predicated region
        $region63: #{complex_forward.1} parent=61 // pred_check
          %p283 = pneg %p58
        $region64: #{complex_forward.1} parent=61 // pred_check_branch
          %285 = sbr.rel (%p283) target = $region66
        $region65: #{complex_forward.1} parent=61 // pred_region
          _
        $region66: #{complex_forward.1} parent=61 // pred_fallthru
          _
        %p286 = pneg %p32
        %p287 = pneg %p29
        %s288 = sand.u32 %s45, 1
        %s289 = sand.u32 %s45, 1
        %s290 = smul.addr %s289, 256
        %s291 = scalar_lea.vmem [#allocation2], %s290
        %p292 = pneg %p58
        %p293 = pneg %p55
        %p294 = pneg %p84
        %p295 = pneg %p81
        %s296 = sand.u32 %s71, 1
        %s297 = scalar_lea.sflag [#allocation4], %s296
        %s298 = sand.u32 %s71, 1
        %s299 = smul.addr %s298, 8
        %s300 = scalar_lea.vmem [#allocation3], %s299
        %v301 = vld [vmem:[%s0] sm:$0xff]
        %v302 = vld [vmem:[%s0 + $0x8] sm:$0xff]
        %v303 = vld [vmem:[%s282] sm:$0xff]
        %v304 = vld [vmem:[%s282 + $0x8] sm:$0xff]
        %v305 = vld [vmem:[%s282 + $0x10] sm:$0xff]
        %v306 = vld [vmem:[%s282 + $0x18] sm:$0xff]
        %v307 = vld [vmem:[%s282 + $0x20] sm:$0xff]
        %v308 = vld [vmem:[%s282 + $0x28] sm:$0xff]
        %v309 = vld [vmem:[%s282 + $0x30] sm:$0xff]
        %v310 = vld [vmem:[%s282 + $0x38] sm:$0xff]
        %v311 = vld [vmem:[%s282 + $0x40] sm:$0xff]
        %v312 = vld [vmem:[%s282 + $0x48] sm:$0xff]
        %v313 = vld [vmem:[%s282 + $0x50] sm:$0xff]
        %v314 = vld [vmem:[%s282 + $0x58] sm:$0xff]
        %v315 = vld [vmem:[%s282 + $0x60] sm:$0xff]
        %v316 = vld [vmem:[%s282 + $0x68] sm:$0xff]
        %v317 = vld [vmem:[%s282 + $0x70] sm:$0xff]
        %v318 = vld [vmem:[%s282 + $0x78] sm:$0xff]
        %v319 = vld [vmem:[%s282 + $0x80] sm:$0xff]
        %v320 = vld [vmem:[%s282 + $0x88] sm:$0xff]
        %v321 = vld [vmem:[%s282 + $0x90] sm:$0xff]
        %v322 = vld [vmem:[%s282 + $0x98] sm:$0xff]
        %v323 = vld [vmem:[%s282 + $0xa0] sm:$0xff]
        %v324 = vld [vmem:[%s282 + $0xa8] sm:$0xff]
        %v325 = vld [vmem:[%s282 + $0xb0] sm:$0xff]
        %v326 = vld [vmem:[%s282 + $0xb8] sm:$0xff]
        %v327 = vld [vmem:[%s282 + $0xc0] sm:$0xff]
        %v328 = vld [vmem:[%s282 + $0xc8] sm:$0xff]
        %v329 = vld [vmem:[%s282 + $0xd0] sm:$0xff]
        %v330 = vld [vmem:[%s282 + $0xd8] sm:$0xff]
        %v331 = vld [vmem:[%s282 + $0xe0] sm:$0xff]
        %v332 = vld [vmem:[%s282 + $0xe8] sm:$0xff]
        %v333 = vld [vmem:[%s282 + $0xf0] sm:$0xff]
        %v334 = vld [vmem:[%s282 + $0xf8] sm:$0xff]
        %335 = vmatprep.subr.mxu0 0.0
        %336 = vmatpush1.msra.mxu0 %v318
        %337 = vmatprep.subr.mxu0 0.0
        %338 = vmatpush1.msra.mxu0 %v317
        %339 = vmatprep.subr.mxu0 0.0
        %340 = vmatpush1.msra.mxu0 %v316
        %341 = vmatprep.subr.mxu0 0.0
        %342 = vmatpush1.msra.mxu0 %v315
        %343 = vmatprep.subr.mxu0 0.0
        %344 = vmatpush1.msra.mxu0 %v314
        %345 = vmatprep.subr.mxu0 0.0
        %346 = vmatpush1.msra.mxu0 %v313
        %347 = vmatprep.subr.mxu0 0.0
        %348 = vmatpush1.msra.mxu0 %v312
        %349 = vmatprep.subr.mxu0 0.0
        %350 = vmatpush1.msra.mxu0 %v311
        %351 = vmatprep.subr.mxu0 0.0
        %352 = vmatpush1.msra.mxu0 %v310
        %353 = vmatprep.subr.mxu0 0.0
        %354 = vmatpush1.msra.mxu0 %v309
        %355 = vmatprep.subr.mxu0 0.0
        %356 = vmatpush1.msra.mxu0 %v308
        %357 = vmatprep.subr.mxu0 0.0
        %358 = vmatpush1.msra.mxu0 %v307
        %359 = vmatprep.subr.mxu0 0.0
        %360 = vmatpush1.msra.mxu0 %v306
        %361 = vmatprep.subr.mxu0 0.0
        %362 = vmatpush1.msra.mxu0 %v305
        %363 = vmatprep.subr.mxu0 0.0
        %364 = vmatpush1.msra.mxu0 %v304
        %365 = vmatprep.subr.mxu0 0.0
        %366 = vmatpush1.msra.mxu0 %v303
        %367 = vmatprep.subr.mxu0 0.0
        %368 = vmatpush2.msra.mxu0 %v334
        %369 = vmatprep.subr.mxu0 0.0
        %370 = vmatpush2.msra.mxu0 %v333
        %371 = vmatprep.subr.mxu0 0.0
        %372 = vmatpush2.msra.mxu0 %v332
        %373 = vmatprep.subr.mxu0 0.0
        %374 = vmatpush2.msra.mxu0 %v331
        %375 = vmatprep.subr.mxu0 0.0
        %376 = vmatpush2.msra.mxu0 %v330
        %377 = vmatprep.subr.mxu0 0.0
        %378 = vmatpush2.msra.mxu0 %v329
        %379 = vmatprep.subr.mxu0 0.0
        %380 = vmatpush2.msra.mxu0 %v328
        %381 = vmatprep.subr.mxu0 0.0
        %382 = vmatpush2.msra.mxu0 %v327
        %383 = vmatprep.subr.mxu0 0.0
        %384 = vmatpush2.msra.mxu0 %v326
        %385 = vmatprep.subr.mxu0 0.0
        %386 = vmatpush2.msra.mxu0 %v325
        %387 = vmatprep.subr.mxu0 0.0
        %388 = vmatpush2.msra.mxu0 %v324
        %389 = vmatprep.subr.mxu0 0.0
        %390 = vmatpush2.msra.mxu0 %v323
        %391 = vmatprep.subr.mxu0 0.0
        %392 = vmatpush2.msra.mxu0 %v322
        %393 = vmatprep.subr.mxu0 0.0
        %394 = vmatpush2.msra.mxu0 %v321
        %395 = vmatprep.subr.mxu0 0.0
        %396 = vmatpush2.msra.mxu0 %v320
        %397 = vmatprep.subr.mxu0 0.0
        %398 = vmatpush2.msra.mxu0 %v319
        %399 = vmatprep.mubr.f32.mxu0 %v302
        %400 = vmatmul.mubr.f32.gmra.mxu0 %v301
        %v401 = vpop.f32.mrf.mxu0
        %v402 = vadd.f32 0.0, %v401
        %v403 = vpop.f32.mrf.mxu0
        %404 = vdwg.mxu0
        %405 = vst [vmem:[%s300] sm:$0xff] %v402
        %s406 = sand.u32 %s71, 1
        %s407 = scalar_lea.sflag [#allocation4], %s406
        %s408 = sand.u32 %s71, 1
        %s409 = smul.addr %s408, 8
        %s410 = scalar_lea.vmem [#allocation3], %s409
        // Predicated region
        $region67: #{complex_forward.1} parent=61 // pred_check
          %p411 = pneg %p81
        $region68: #{complex_forward.1} parent=61 // pred_check_branch
          %413 = sbr.rel (%p411) target = $region70
        $region69: #{complex_forward.1} parent=61 // pred_region
          %s415 = ssub.s32 128, 128
          %416 = vsyncadd %s407, %s415
          %s417 = smul.addr %s16, 128
          %s418 = scalar_lea.hbm %s2, %s417
          %s420 = sshll.u32 %s410, 4
          %s421 = int_to_ptr.vmem [resolvable:$true] %s420
          %423 = dma.vmem_to_hbm [thread:$0]  %s421, 128, %s418, %s407
        $region70: #{complex_forward.1} parent=61 // pred_fallthru
          _
      $region62: #{complex_forward.1} parent=5 // pred_fallthru
        _
      %p424 = scmp.le.s32.totalorder 2, %s11
      // Predicated region
      $region71: #{complex_forward.1} parent=5 // pred_check
        %p425 = pneg %p424
      $region72: #{complex_forward.1} parent=5 // pred_check_branch
        %427 = sbr.rel (%p425) target = $region74
      $region73: #{complex_forward.1} parent=5 // pred_region
        %s428 = ssub.s32 %s11, 2
        // Predicated region
        $region75: #{complex_forward.1} parent=73 // pred_check
          %p429 = pneg %p87
        $region76: #{complex_forward.1} parent=73 // pred_check_branch
          %431 = sbr.rel (%p429) target = $region78
        $region77: #{complex_forward.1} parent=73 // pred_region
          %s432 = sand.u32 %s72, 1
          %s433 = scalar_lea.sflag [#allocation4], %s432
          %s434 = sand.u32 %s72, 1
          %s435 = smul.addr %s434, 8
          %s436 = scalar_lea.vmem [#allocation3], %s435
          %437 = dma.done %s433, 128
        $region78: #{complex_forward.1} parent=73 // pred_fallthru
          _
      $region74: #{complex_forward.1} parent=5 // pred_fallthru
        _
    $region6: #{complex_forward.1} parent=1 // loop_footer
      %s15 = sadd.s32 1, %s11
    $region7: #{complex_forward.1} parent=1 // loop_footer_branch
      %10 = sbr.rel target = $region3
    $region8: #{complex_forward.1} parent=1 // loop_exit
      _
    %438 = vsyncpa [#allocation4], 1
    %s439 = scalar_lea.sflag [#allocation4], 1
    %440 = vsyncpa %s439, 1

</llo_original>
